<compile_context>
chip_gen: v6e
topology: v6e:2x2x1
jax: 0.10.0
libtpu: 0.0.40
codegen_flags: <defaults>
</compile_context>

<pallas_src>
import functools

import jax
import jax.numpy as jnp
from jax import lax
from jax.experimental import pallas as pl
from jax.experimental.pallas import tpu as pltpu


def _compression_kernel(x_ref, w_ref, b_ref, o_ref, acc_ref, *, TL, TJ, B):
    """One grid step: TL output positions x one chunk of TJ grouped taps.

    x_ref:  (B, M_pad, Cg)   phase-grouped input (full array, grid-invariant)
    w_ref:  (TJ, Cg, O)      current chunk of the grouped weight
    b_ref:  (1, O)           bias
    o_ref:  (B, TL, O)       output block of the (B, L_pad, O) kernel output
    acc_ref:(B*TL, O) f32    accumulator, resident across the tap (reduction) axis
    """
    i = pl.program_id(0)               # output-position block index
    r = pl.program_id(1)               # tap-chunk (reduction) index

    @pl.when(r == 0)
    def _():
        acc_ref[...] = jnp.zeros_like(acc_ref)

    Cg = x_ref.shape[2]
    O = w_ref.shape[2]
    base = i * TL + r * TJ             # first grouped row needed by tap j=0

    partial = jnp.zeros((B * TL, O), jnp.float32)
    for j in range(TJ):                # static, small tap loop (TJ = K/stride chunk)
        xj = x_ref[:, pl.ds(base + j, TL), :]          # (B, TL, Cg) contiguous slice
        xj = xj.reshape(B * TL, Cg)                    # free: TL % 8 == 0, lane dim kept
        partial = partial + jnp.dot(xj, w_ref[j],
                                    preferred_element_type=jnp.float32)
    acc_ref[...] += partial

    @pl.when(r == pl.num_programs(1) - 1)
    def _():
        out = acc_ref[...] + b_ref[...]                # (B*TL, O) + (1, O)
        o_ref[...] = out.reshape(B, TL, O).astype(o_ref.dtype)


def compression_forward(mem, weight, bias, compression_rate, *, tl=8,
                        compute_dtype=None):
    """mem: (S, B, D), weight: (D, D, K=D) [out_ch, in_ch, kernel], bias: (D,)."""
    S, B, D = mem.shape
    O, Cin, K = weight.shape
    assert O == D and Cin == D and K == D
    stride = compression_rate
    L_out = (S - K) // stride + 1
    assert L_out >= 1

    TL = tl                               # output positions per grid step (mult. of 8)
    L_pad = ((L_out + TL - 1) // TL) * TL
    J = -(-K // stride)                   # ceil(K / stride) grouped taps
    K_pad = J * stride
    Cg = stride * D                       # grouped channel count (matmul contraction)

    # Tap-chunk size: largest divisor of J whose weight chunk stays modest.
    TJ = J
    max_w_chunk_bytes = 8 * 1024 * 1024
    while TJ > 1 and TJ * Cg * O * 4 > max_w_chunk_bytes:
        t = TJ - 1
        while J % t != 0:
            t -= 1
        TJ = t
    J_blocks = J // TJ

    # ---- wrapper-side layout plumbing (pure XLA, cheap) ----
    # Grouped input: x_g[b, m, p*D + c] = mem[m*stride + p, b, c]  (zero-padded).
    M_pad = L_pad + J - 1                 # grouped rows the kernel may touch
    S_pad = M_pad * stride
    x = jnp.transpose(mem, (1, 0, 2))                         # (B, S, D)
    x = jnp.pad(x, ((0, 0), (0, S_pad - S), (0, 0)))
    x_g = x.reshape(B, M_pad, Cg)                             # free reshape

    # Grouped weight: w_g[j, p*D + c, o] = weight[o, c, j*stride + p] (zero-padded taps).
    w_t = jnp.transpose(weight, (2, 1, 0))                    # (K, C, O)
    w_t = jnp.pad(w_t, ((0, K_pad - K), (0, 0), (0, 0)))
    w_g = w_t.reshape(J, Cg, O)
    b2 = bias.reshape(1, O)

    if compute_dtype is not None:                             # e.g. jnp.bfloat16
        x_g = x_g.astype(compute_dtype)
        w_g = w_g.astype(compute_dtype)

    kernel = functools.partial(_compression_kernel, TL=TL, TJ=TJ, B=B)

    # Explicit scoped-VMEM budget: input (2 bufs) + weight chunk (2 bufs) +
    # output block (2 bufs) + f32 accumulator, with headroom.
    est_bytes = (2 * x_g.size * x_g.dtype.itemsize
                 + 2 * TJ * Cg * O * w_g.dtype.itemsize
                 + 2 * B * TL * O * mem.dtype.itemsize
                 + B * TL * O * 4
                 + (1 << 20))
    vmem_limit = int(max(32 * 2**20, min(2 * est_bytes, 96 * 2**20)))

    out = pl.pallas_call(
        kernel,
        out_shape=jax.ShapeDtypeStruct((B, L_pad, O), mem.dtype),
        grid=(L_pad // TL, J_blocks),
        in_specs=[
            pl.BlockSpec((B, M_pad, Cg), lambda i, r: (0, 0, 0)),   # grid-invariant
            pl.BlockSpec((TJ, Cg, O), lambda i, r: (r, 0, 0)),      # weight chunk
            pl.BlockSpec((1, O), lambda i, r: (0, 0)),              # bias
        ],
        out_specs=pl.BlockSpec((B, TL, O), lambda i, r: (0, i, 0)),
        scratch_shapes=[pltpu.VMEM((B * TL, O), jnp.float32)],
        compiler_params=pltpu.CompilerParams(
            dimension_semantics=("parallel", "arbitrary"),
            vmem_limit_bytes=vmem_limit),
    )(x_g, w_g, b2)

    out = out[:, :L_out, :]                    # drop padded output positions
    return jnp.transpose(out, (1, 0, 2))       # (L_out, B, D)


def compression_reference(mem, weight, bias, compression_rate):
    """Pure-JAX reference matching torch.nn.Conv1d semantics."""
    x = jnp.transpose(mem, (1, 2, 0))  # (B, C, S)  == mem.permute(1, 2, 0)
    y = lax.conv_general_dilated(
        x, weight,
        window_strides=(compression_rate,),
        padding="VALID",
        dimension_numbers=("NCW", "OIW", "NCW"),
    )
    y = y + bias[None, :, None]
    return jnp.transpose(y, (2, 0, 1))  # (L_out, B, C)


if __name__ == "__main__":
    dim_model = 16
    seq = 32
    batch = 2

    key = jax.random.PRNGKey(0)
    k_mem, k_w, k_b = jax.random.split(key, 3)

    mem = jax.random.normal(k_mem, (seq, batch, dim_model), dtype=jnp.float32)

    # Deterministic Conv1d parameter init (PyTorch-style uniform bound).
    fan_in = dim_model * dim_model  # in_channels * kernel_size
    bound = 1.0 / (fan_in ** 0.5)
    weight = jax.random.uniform(
        k_w, (dim_model, dim_model, dim_model),  # (out_ch, in_ch, kernel)
        minval=-bound, maxval=bound, dtype=jnp.float32)
    bias = jax.random.uniform(
        k_b, (dim_model,), minval=-bound, maxval=bound, dtype=jnp.float32)

    # Primary config (compression_rate = 4, divides K) and a second one with a
    # stride that does not divide K, exercising the tap-padding path.
    for compression_rate in (4, 3):
        out = compression_forward(mem, weight, bias, compression_rate)
        out = jax.block_until_ready(out)
        ref = compression_reference(mem, weight, bias, compression_rate)
        assert out.shape == ref.shape, (compression_rate, out.shape, ref.shape)
        assert jnp.allclose(out, ref, atol=1e-4, rtol=1e-4), (
            f"mismatch vs reference (rate={compression_rate})")

    print("KERNEL_OK")
</pallas_src>

<mosaic_0001>
module attributes {stable_mosaic.version = 11 : i64} {
  func.func @_compression_kernel(%arg0: i32, %arg1: i32, %arg2: memref<2x11x64xf32, #tpu.memory_space<vmem>>, %arg3: memref<4x64x16xf32, #tpu.memory_space<vmem>>, %arg4: memref<1x16xf32, #tpu.memory_space<vmem>>, %arg5: memref<2x8x16xf32, #tpu.memory_space<vmem>>, %arg6: memref<16x16xf32, #tpu.memory_space<vmem>>) attributes {dimension_semantics = [#tpu.dimension_semantics<parallel>, #tpu.dimension_semantics<arbitrary>], iteration_bounds = array<i64: 1, 1>, scalar_prefetch = 0 : i64, scratch_operands = 1 : i64, tpu.core_type = #tpu.core_type<tc>, window_params = [{pipeline_mode = #tpu.pipeline_mode<synchronous>, transform_indices = @transform_0, window_bounds = array<i64: 2, 11, 64>}, {transform_indices = @transform_1, window_bounds = array<i64: 4, 64, 16>}, {pipeline_mode = #tpu.pipeline_mode<synchronous>, transform_indices = @transform_2, window_bounds = array<i64: 1, 16>}, {transform_indices = @transform_3, window_bounds = array<i64: 2, 8, 16>}]} {
    %c0_i32 = arith.constant 0 : i32
    %0 = arith.cmpi eq, %arg1, %c0_i32 : i32
    %1 = arith.extui %0 : i1 to i32
    %c0_i32_0 = arith.constant 0 : i32
    %2 = arith.cmpi ne, %1, %c0_i32_0 : i32
    scf.if %2 {
      %cst_28 = arith.constant 0.000000e+00 : f32
      %45 = vector.broadcast %cst_28 : f32 to vector<16x16xf32>
      %c0_29 = arith.constant 0 : index
      %c0_30 = arith.constant 0 : index
      %46 = vector.load %arg6[%c0_29, %c0_30] : memref<16x16xf32, #tpu.memory_space<vmem>>, vector<16x16xf32>
      tpu.vector_store %arg6[%c0_29, %c0_30], %45 {strides = array<i32>} : memref<16x16xf32, #tpu.memory_space<vmem>>, vector<16x16xf32>,
    } else {
    }
    %c8_i32 = arith.constant 8 : i32
    %3 = arith.muli %arg0, %c8_i32 : i32
    %c4_i32 = arith.constant 4 : i32
    %4 = arith.muli %arg1, %c4_i32 : i32
    %5 = arith.addi %3, %4 : i32
    %cst = arith.constant 0.000000e+00 : f32
    %6 = vector.broadcast %cst : f32 to vector<16x16xf32>
    %c0_i32_1 = arith.constant 0 : i32
    %7 = arith.addi %5, %c0_i32_1 : i32
    %c0 = arith.constant 0 : index
    %8 = arith.index_cast %7 : i32 to index
    %c0_2 = arith.constant 0 : index
    %9 = vector.load %arg2[%c0, %8, %c0_2] : memref<2x11x64xf32, #tpu.memory_space<vmem>>, vector<2x8x64xf32>
    %10 = vector.shape_cast %9 : vector<2x8x64xf32> to vector<16x64xf32>
    %c0_3 = arith.constant 0 : index
    %c0_4 = arith.constant 0 : index
    %c0_5 = arith.constant 0 : index
    %11 = vector.load %arg3[%c0_3, %c0_4, %c0_5] : memref<4x64x16xf32, #tpu.memory_space<vmem>>, vector<1x64x16xf32>
    %12 = vector.shape_cast %11 : vector<1x64x16xf32> to vector<64x16xf32>
    %cst_6 = arith.constant dense<0.000000e+00> : vector<16x16xf32>
    %13 = tpu.matmul %10, %12, %cst_6 {dimension_numbers = #tpu.dot_dimension_numbers<[1], [0], [0], [1], [0, 0, 1, 1], [], []>} : vector<16x64xf32>, vector<64x16xf32>, vector<16x16xf32> -> vector<16x16xf32>
    %14 = arith.addf %6, %13 : vector<16x16xf32>
    %c1_i32 = arith.constant 1 : i32
    %15 = arith.addi %5, %c1_i32 : i32
    %c0_7 = arith.constant 0 : index
    %16 = arith.index_cast %15 : i32 to index
    %c0_8 = arith.constant 0 : index
    %17 = vector.load %arg2[%c0_7, %16, %c0_8] : memref<2x11x64xf32, #tpu.memory_space<vmem>>, vector<2x8x64xf32>
    %18 = vector.shape_cast %17 : vector<2x8x64xf32> to vector<16x64xf32>
    %c1 = arith.constant 1 : index
    %c0_9 = arith.constant 0 : index
    %c0_10 = arith.constant 0 : index
    %19 = vector.load %arg3[%c1, %c0_9, %c0_10] : memref<4x64x16xf32, #tpu.memory_space<vmem>>, vector<1x64x16xf32>
    %20 = vector.shape_cast %19 : vector<1x64x16xf32> to vector<64x16xf32>
    %cst_11 = arith.constant dense<0.000000e+00> : vector<16x16xf32>
    %21 = tpu.matmul %18, %20, %cst_11 {dimension_numbers = #tpu.dot_dimension_numbers<[1], [0], [0], [1], [0, 0, 1, 1], [], []>} : vector<16x64xf32>, vector<64x16xf32>, vector<16x16xf32> -> vector<16x16xf32>
    %22 = arith.addf %14, %21 : vector<16x16xf32>
    %c2_i32 = arith.constant 2 : i32
    %23 = arith.addi %5, %c2_i32 : i32
    %c0_12 = arith.constant 0 : index
    %24 = arith.index_cast %23 : i32 to index
    %c0_13 = arith.constant 0 : index
    %25 = vector.load %arg2[%c0_12, %24, %c0_13] : memref<2x11x64xf32, #tpu.memory_space<vmem>>, vector<2x8x64xf32>
    %26 = vector.shape_cast %25 : vector<2x8x64xf32> to vector<16x64xf32>
    %c2 = arith.constant 2 : index
    %c0_14 = arith.constant 0 : index
    %c0_15 = arith.constant 0 : index
    %27 = vector.load %arg3[%c2, %c0_14, %c0_15] : memref<4x64x16xf32, #tpu.memory_space<vmem>>, vector<1x64x16xf32>
    %28 = vector.shape_cast %27 : vector<1x64x16xf32> to vector<64x16xf32>
    %cst_16 = arith.constant dense<0.000000e+00> : vector<16x16xf32>
    %29 = tpu.matmul %26, %28, %cst_16 {dimension_numbers = #tpu.dot_dimension_numbers<[1], [0], [0], [1], [0, 0, 1, 1], [], []>} : vector<16x64xf32>, vector<64x16xf32>, vector<16x16xf32> -> vector<16x16xf32>
    %30 = arith.addf %22, %29 : vector<16x16xf32>
    %c3_i32 = arith.constant 3 : i32
    %31 = arith.addi %5, %c3_i32 : i32
    %c0_17 = arith.constant 0 : index
    %32 = arith.index_cast %31 : i32 to index
    %c0_18 = arith.constant 0 : index
    %33 = vector.load %arg2[%c0_17, %32, %c0_18] : memref<2x11x64xf32, #tpu.memory_space<vmem>>, vector<2x8x64xf32>
    %34 = vector.shape_cast %33 : vector<2x8x64xf32> to vector<16x64xf32>
    %c3 = arith.constant 3 : index
    %c0_19 = arith.constant 0 : index
    %c0_20 = arith.constant 0 : index
    %35 = vector.load %arg3[%c3, %c0_19, %c0_20] : memref<4x64x16xf32, #tpu.memory_space<vmem>>, vector<1x64x16xf32>
    %36 = vector.shape_cast %35 : vector<1x64x16xf32> to vector<64x16xf32>
    %cst_21 = arith.constant dense<0.000000e+00> : vector<16x16xf32>
    %37 = tpu.matmul %34, %36, %cst_21 {dimension_numbers = #tpu.dot_dimension_numbers<[1], [0], [0], [1], [0, 0, 1, 1], [], []>} : vector<16x64xf32>, vector<64x16xf32>, vector<16x16xf32> -> vector<16x16xf32>
    %38 = arith.addf %30, %37 : vector<16x16xf32>
    %c0_22 = arith.constant 0 : index
    %c0_23 = arith.constant 0 : index
    %39 = vector.load %arg6[%c0_22, %c0_23] : memref<16x16xf32, #tpu.memory_space<vmem>>, vector<16x16xf32>
    %40 = arith.addf %39, %38 : vector<16x16xf32>
    %c0_24 = arith.constant 0 : index
    %c0_25 = arith.constant 0 : index
    %41 = vector.load %arg6[%c0_24, %c0_25] : memref<16x16xf32, #tpu.memory_space<vmem>>, vector<16x16xf32>
    tpu.vector_store %arg6[%c0_24, %c0_25], %40 {strides = array<i32>} : memref<16x16xf32, #tpu.memory_space<vmem>>, vector<16x16xf32>,
    %c0_i32_26 = arith.constant 0 : i32
    %42 = arith.cmpi eq, %arg1, %c0_i32_26 : i32
    %43 = arith.extui %42 : i1 to i32
    %c0_i32_27 = arith.constant 0 : i32
    %44 = arith.cmpi ne, %43, %c0_i32_27 : i32
    scf.if %44 {
      %c0_28 = arith.constant 0 : index
      %c0_29 = arith.constant 0 : index
      %45 = vector.load %arg6[%c0_28, %c0_29] : memref<16x16xf32, #tpu.memory_space<vmem>>, vector<16x16xf32>
      %c0_30 = arith.constant 0 : index
      %c0_31 = arith.constant 0 : index
      %46 = vector.load %arg4[%c0_30, %c0_31] : memref<1x16xf32, #tpu.memory_space<vmem>>, vector<1x16xf32>
      %47 = vector.broadcast %46 : vector<1x16xf32> to vector<16x16xf32>
      %48 = arith.addf %45, %47 : vector<16x16xf32>
      %49 = vector.shape_cast %48 : vector<16x16xf32> to vector<2x8x16xf32>
      %c0_32 = arith.constant 0 : index
      %c0_33 = arith.constant 0 : index
      %c0_34 = arith.constant 0 : index
      %50 = vector.load %arg5[%c0_32, %c0_33, %c0_34] : memref<2x8x16xf32, #tpu.memory_space<vmem>>, vector<2x8x16xf32>
      tpu.vector_store %arg5[%c0_32, %c0_33, %c0_34], %49 {strides = array<i32>} : memref<2x8x16xf32, #tpu.memory_space<vmem>>, vector<2x8x16xf32>,
    } else {
    }
    return
  }
  func.func @transform_0(%arg0: i32, %arg1: i32) -> (i32, i32, i32) {
    %c0_i32 = arith.constant 0 : i32
    %c0_i32_0 = arith.constant 0 : i32
    %c0_i32_1 = arith.constant 0 : i32
    %c0_i32_2 = arith.constant 0 : i32
    return %c0_i32, %c0_i32_0, %c0_i32_1 : i32, i32, i32
  }
  func.func @transform_1(%arg0: i32, %arg1: i32) -> (i32, i32, i32) {
    %c0_i32 = arith.constant 0 : i32
    %c0_i32_0 = arith.constant 0 : i32
    %c0_i32_1 = arith.constant 0 : i32
    return %arg1, %c0_i32, %c0_i32_0 : i32, i32, i32
  }
  func.func @transform_2(%arg0: i32, %arg1: i32) -> (i32, i32) {
    %c0_i32 = arith.constant 0 : i32
    %c0_i32_0 = arith.constant 0 : i32
    %c0_i32_1 = arith.constant 0 : i32
    return %c0_i32, %c0_i32_0 : i32, i32
  }
  func.func @transform_3(%arg0: i32, %arg1: i32) -> (i32, i32, i32) {
    %c0_i32 = arith.constant 0 : i32
    %c0_i32_0 = arith.constant 0 : i32
    %c0_i32_1 = arith.constant 0 : i32
    return %c0_i32, %arg0, %c0_i32_0 : i32, i32, i32
  }
}

</mosaic_0001>

<llo_original>
// kernel: tpu_custom_call.1
$region0: #{tpu_custom_call.1}
  #allocation0 [shape = 'u32[]', space=smem, size = 0x4, offset = 0x4, fixed_abs, tag = 'smem constant byte address 0x4 - core index']
  #allocation1 [shape = 'u32[144,128]{1,0:T(1,128)}', space=vmem, size = 0x12000, scoped, tag = 'internal scratch']
  #allocation2 [shape = 'f32[16,16]{1,0:T(8,128)}', space=vmem, size = 0x2000, scoped, tag = 'scratch operand']
  %s0 = inlined_call_operand.vmem [shape: f32[2,11,64], index: 0, kind: input, shape index: {}]
  %s1 = inlined_call_operand.vmem [shape: f32[4,64,16], index: 1, kind: input, shape index: {}]
  %s2 = inlined_call_operand.vmem [shape: f32[1,16], index: 2, kind: input, shape index: {}]
  %s3 = inlined_call_operand.hbm [shape: f32[2,8,16], index: 3, kind: output, shape index: {}]
  %s4 = sld [smem:[#allocation0]]
  $region30: #{tpu_custom_call.1} parent=0
    _
  %s6 = ssub.s32 1, %s4
  %s7 = scalar_select 0, %s6, %s4
  $region1: #{tpu_custom_call.1} parent=0
    #allocation3 [shape = 'u8[8192]{0}', space=vmem, size = 0x2000, scoped, tag = 'output window, operand 0, single buffered']
    #allocation4 [shape = 's32[1]{0}', space=sflag, size = 0x4, scoped, tag = 'scoped memory for tpu_custom_call.1']
    %8 = vsyncpa [#allocation4], 0
    // Predicated region
    $region2: #{tpu_custom_call.1} parent=1 // pred_check
      _
    $region3: #{tpu_custom_call.1} parent=1 // pred_check_branch
      %10 = sbr.rel (0) target = $region5
    $region4: #{tpu_custom_call.1} parent=1 // pred_region
      _
    $region5: #{tpu_custom_call.1} parent=1 // pred_fallthru
      _
    // Predicated region
    $region6: #{tpu_custom_call.1} parent=1 // pred_check
      _
    $region7: #{tpu_custom_call.1} parent=1 // pred_check_branch
      %12 = sbr.rel (0) target = $region9
    $region8: #{tpu_custom_call.1} parent=1 // pred_region
      _
    $region9: #{tpu_custom_call.1} parent=1 // pred_fallthru
      _
    // Predicated region
    $region10: #{tpu_custom_call.1} parent=1 // pred_check
      _
    $region11: #{tpu_custom_call.1} parent=1 // pred_check_branch
      %14 = sbr.rel (0) target = $region13
    $region12: #{tpu_custom_call.1} parent=1 // pred_region
      _
    $region13: #{tpu_custom_call.1} parent=1 // pred_fallthru
      _
    %p15 = scmp.eq.s32.totalorder 0, 0
    // Predicated region
    $region14: #{tpu_custom_call.1} parent=1 // pred_check
      %p16 = pneg %p15
    $region15: #{tpu_custom_call.1} parent=1 // pred_check_branch
      %18 = sbr.rel (%p16) target = $region17
    $region16: #{tpu_custom_call.1} parent=1 // pred_region
      %vm19 = vcmask 130048
      %20 = vst.msk [vmem:[#allocation2] sm:$0xff] %vm19, 0.0
      %21 = vst.msk [vmem:[#allocation2 + $0x8] sm:$0xff] %vm19, 0.0
    $region17: #{tpu_custom_call.1} parent=1 // pred_fallthru
      _
    %s22 = smul.u32 0, 8
    %s23 = smul.u32 0, 4
    %s24 = sadd.s32 %s22, %s23
    %s25 = scalar_lea.vmem %s0, %s24
    %v26 = vld [vmem:[%s25] sm:$0xff]
    %v27 = vld [vmem:[%s25 + $0x10] sm:$0xff]
    %v28 = vld [vmem:[%s1] sm:$0xff]
    %v29 = vld [vmem:[%s1 + $0x8] sm:$0xff]
    %v30 = vld [vmem:[%s1 + $0x10] sm:$0xff]
    %v31 = vld [vmem:[%s1 + $0x18] sm:$0xff]
    %v32 = vld [vmem:[%s1 + $0x20] sm:$0xff]
    %v33 = vld [vmem:[%s1 + $0x28] sm:$0xff]
    %v34 = vld [vmem:[%s1 + $0x30] sm:$0xff]
    %v35 = vld [vmem:[%s1 + $0x38] sm:$0xff]
    %s36 = sadd.s32 %s24, 1
    %s37 = scalar_lea.vmem %s0, %s36
    %v38 = vld [vmem:[%s37] sm:$0xff]
    %v39 = vld [vmem:[%s37 + $0x10] sm:$0xff]
    %s40 = scalar_lea.vmem %s1, 64
    %v41 = vld [vmem:[%s40] sm:$0xff]
    %v42 = vld [vmem:[%s40 + $0x8] sm:$0xff]
    %v43 = vld [vmem:[%s40 + $0x10] sm:$0xff]
    %v44 = vld [vmem:[%s40 + $0x18] sm:$0xff]
    %v45 = vld [vmem:[%s40 + $0x20] sm:$0xff]
    %v46 = vld [vmem:[%s40 + $0x28] sm:$0xff]
    %v47 = vld [vmem:[%s40 + $0x30] sm:$0xff]
    %v48 = vld [vmem:[%s40 + $0x38] sm:$0xff]
    %vm49 = vcmask 523264
    %v51 = vsel %vm49, %v38, 0
    %v54 = vsel %vm49, %v39, 0
    %56 = vmatprep.subr.mxu0 0.0
    %57 = vmatpush1.msra.mxu0 0.0
    %58 = vmatprep.subr.mxu0 0.0
    %59 = vmatpush1.msra.mxu0 0.0
    %60 = vmatprep.subr.mxu0 0.0
    %61 = vmatpush1.msra.mxu0 0.0
    %62 = vmatprep.subr.mxu0 0.0
    %63 = vmatpush1.msra.mxu0 0.0
    %64 = vmatprep.subr.mxu0 0.0
    %65 = vmatpush1.msra.mxu0 0.0
    %66 = vmatprep.subr.mxu0 0.0
    %67 = vmatpush1.msra.mxu0 0.0
    %68 = vmatprep.subr.mxu0 0.0
    %69 = vmatpush1.msra.mxu0 0.0
    %70 = vmatprep.subr.mxu0 0.0
    %71 = vmatpush1.msra.mxu0 0.0
    %72 = vmatprep.subr.mxu0 0.0
    %73 = vmatpush1.msra.mxu0 %v48
    %74 = vmatprep.subr.mxu0 0.0
    %75 = vmatpush1.msra.mxu0 %v47
    %76 = vmatprep.subr.mxu0 0.0
    %77 = vmatpush1.msra.mxu0 %v46
    %78 = vmatprep.subr.mxu0 0.0
    %79 = vmatpush1.msra.mxu0 %v45
    %80 = vmatprep.subr.mxu0 0.0
    %81 = vmatpush1.msra.mxu0 %v44
    %82 = vmatprep.subr.mxu0 0.0
    %83 = vmatpush1.msra.mxu0 %v43
    %84 = vmatprep.subr.mxu0 0.0
    %85 = vmatpush1.msra.mxu0 %v42
    %86 = vmatprep.subr.mxu0 0.0
    %87 = vmatpush1.msra.mxu0 %v41
    %88 = vmatprep.subr.mxu0 0.0
    %89 = vmatpush2.msra.mxu0 0.0
    %90 = vmatprep.subr.mxu0 0.0
    %91 = vmatpush2.msra.mxu0 0.0
    %92 = vmatprep.subr.mxu0 0.0
    %93 = vmatpush2.msra.mxu0 0.0
    %94 = vmatprep.subr.mxu0 0.0
    %95 = vmatpush2.msra.mxu0 0.0
    %96 = vmatprep.subr.mxu0 0.0
    %97 = vmatpush2.msra.mxu0 0.0
    %98 = vmatprep.subr.mxu0 0.0
    %99 = vmatpush2.msra.mxu0 0.0
    %100 = vmatprep.subr.mxu0 0.0
    %101 = vmatpush2.msra.mxu0 0.0
    %102 = vmatprep.subr.mxu0 0.0
    %103 = vmatpush2.msra.mxu0 0.0
    %104 = vmatprep.subr.mxu0 0.0
    %105 = vmatpush2.msra.mxu0 0.0
    %106 = vmatprep.subr.mxu0 0.0
    %107 = vmatpush2.msra.mxu0 0.0
    %108 = vmatprep.subr.mxu0 0.0
    %109 = vmatpush2.msra.mxu0 0.0
    %110 = vmatprep.subr.mxu0 0.0
    %111 = vmatpush2.msra.mxu0 0.0
    %112 = vmatprep.subr.mxu0 0.0
    %113 = vmatpush2.msra.mxu0 0.0
    %114 = vmatprep.subr.mxu0 0.0
    %115 = vmatpush2.msra.mxu0 0.0
    %116 = vmatprep.subr.mxu0 0.0
    %117 = vmatpush2.msra.mxu0 0.0
    %118 = vmatprep.subr.mxu0 0.0
    %119 = vmatpush2.msra.mxu0 0.0
    %120 = vmatprep.mubr.f32.mxu0 0.0
    %121 = vmatmul.mubr.f32.gmra.mxu0 %v51
    %v122 = vpop.f32.mrf.mxu0
    %v123 = vadd.f32 0.0, %v122
    %v124 = vpop.f32.mrf.mxu0
    %125 = vmatprep.mubr.f32.mxu0 0.0
    %126 = vmatmul.mubr.f32.gmra.mxu0 %v54
    %v127 = vpop.f32.mrf.mxu0
    %v128 = vadd.f32 0.0, %v127
    %v129 = vpop.f32.mrf.mxu0
    %130 = vdwg.mxu0
    %v132 = vsel %vm49, %v26, 0
    %v135 = vsel %vm49, %v27, 0
    %137 = vmatprep.subr.mxu0 0.0
    %138 = vmatpush1.msra.mxu0 0.0
    %139 = vmatprep.subr.mxu0 0.0
    %140 = vmatpush1.msra.mxu0 0.0
    %141 = vmatprep.subr.mxu0 0.0
    %142 = vmatpush1.msra.mxu0 0.0
    %143 = vmatprep.subr.mxu0 0.0
    %144 = vmatpush1.msra.mxu0 0.0
    %145 = vmatprep.subr.mxu0 0.0
    %146 = vmatpush1.msra.mxu0 0.0
    %147 = vmatprep.subr.mxu0 0.0
    %148 = vmatpush1.msra.mxu0 0.0
    %149 = vmatprep.subr.mxu0 0.0
    %150 = vmatpush1.msra.mxu0 0.0
    %151 = vmatprep.subr.mxu0 0.0
    %152 = vmatpush1.msra.mxu0 0.0
    %153 = vmatprep.subr.mxu0 0.0
    %154 = vmatpush1.msra.mxu0 %v35
    %155 = vmatprep.subr.mxu0 0.0
    %156 = vmatpush1.msra.mxu0 %v34
    %157 = vmatprep.subr.mxu0 0.0
    %158 = vmatpush1.msra.mxu0 %v33
    %159 = vmatprep.subr.mxu0 0.0
    %160 = vmatpush1.msra.mxu0 %v32
    %161 = vmatprep.subr.mxu0 0.0
    %162 = vmatpush1.msra.mxu0 %v31
    %163 = vmatprep.subr.mxu0 0.0
    %164 = vmatpush1.msra.mxu0 %v30
    %165 = vmatprep.subr.mxu0 0.0
    %166 = vmatpush1.msra.mxu0 %v29
    %167 = vmatprep.subr.mxu0 0.0
    %168 = vmatpush1.msra.mxu0 %v28
    %169 = vmatprep.subr.mxu0 0.0
    %170 = vmatpush2.msra.mxu0 0.0
    %171 = vmatprep.subr.mxu0 0.0
    %172 = vmatpush2.msra.mxu0 0.0
    %173 = vmatprep.subr.mxu0 0.0
    %174 = vmatpush2.msra.mxu0 0.0
    %175 = vmatprep.subr.mxu0 0.0
    %176 = vmatpush2.msra.mxu0 0.0
    %177 = vmatprep.subr.mxu0 0.0
    %178 = vmatpush2.msra.mxu0 0.0
    %179 = vmatprep.subr.mxu0 0.0
    %180 = vmatpush2.msra.mxu0 0.0
    %181 = vmatprep.subr.mxu0 0.0
    %182 = vmatpush2.msra.mxu0 0.0
    %183 = vmatprep.subr.mxu0 0.0
    %184 = vmatpush2.msra.mxu0 0.0
    %185 = vmatprep.subr.mxu0 0.0
    %186 = vmatpush2.msra.mxu0 0.0
    %187 = vmatprep.subr.mxu0 0.0
    %188 = vmatpush2.msra.mxu0 0.0
    %189 = vmatprep.subr.mxu0 0.0
    %190 = vmatpush2.msra.mxu0 0.0
    %191 = vmatprep.subr.mxu0 0.0
    %192 = vmatpush2.msra.mxu0 0.0
    %193 = vmatprep.subr.mxu0 0.0
    %194 = vmatpush2.msra.mxu0 0.0
    %195 = vmatprep.subr.mxu0 0.0
    %196 = vmatpush2.msra.mxu0 0.0
    %197 = vmatprep.subr.mxu0 0.0
    %198 = vmatpush2.msra.mxu0 0.0
    %199 = vmatprep.subr.mxu0 0.0
    %200 = vmatpush2.msra.mxu0 0.0
    %201 = vmatprep.mubr.f32.mxu0 0.0
    %202 = vmatmul.mubr.f32.gmra.mxu0 %v132
    %v203 = vpop.f32.mrf.mxu0
    %v204 = vadd.f32 %v123, %v203
    %v205 = vpop.f32.mrf.mxu0
    %206 = vmatprep.mubr.f32.mxu0 0.0
    %207 = vmatmul.mubr.f32.gmra.mxu0 %v135
    %v208 = vpop.f32.mrf.mxu0
    %v209 = vadd.f32 %v128, %v208
    %v210 = vpop.f32.mrf.mxu0
    %211 = vdwg.mxu0
    %s212 = sadd.s32 %s24, 2
    %s213 = scalar_lea.vmem %s0, %s212
    %v214 = vld [vmem:[%s213] sm:$0xff]
    %v215 = vld [vmem:[%s213 + $0x10] sm:$0xff]
    %s216 = scalar_lea.vmem %s1, 128
    %v217 = vld [vmem:[%s216] sm:$0xff]
    %v218 = vld [vmem:[%s216 + $0x8] sm:$0xff]
    %v219 = vld [vmem:[%s216 + $0x10] sm:$0xff]
    %v220 = vld [vmem:[%s216 + $0x18] sm:$0xff]
    %v221 = vld [vmem:[%s216 + $0x20] sm:$0xff]
    %v222 = vld [vmem:[%s216 + $0x28] sm:$0xff]
    %v223 = vld [vmem:[%s216 + $0x30] sm:$0xff]
    %v224 = vld [vmem:[%s216 + $0x38] sm:$0xff]
    %v226 = vsel %vm49, %v214, 0
    %v229 = vsel %vm49, %v215, 0
    %231 = vmatprep.subr.mxu0 0.0
    %232 = vmatpush1.msra.mxu0 0.0
    %233 = vmatprep.subr.mxu0 0.0
    %234 = vmatpush1.msra.mxu0 0.0
    %235 = vmatprep.subr.mxu0 0.0
    %236 = vmatpush1.msra.mxu0 0.0
    %237 = vmatprep.subr.mxu0 0.0
    %238 = vmatpush1.msra.mxu0 0.0
    %239 = vmatprep.subr.mxu0 0.0
    %240 = vmatpush1.msra.mxu0 0.0
    %241 = vmatprep.subr.mxu0 0.0
    %242 = vmatpush1.msra.mxu0 0.0
    %243 = vmatprep.subr.mxu0 0.0
    %244 = vmatpush1.msra.mxu0 0.0
    %245 = vmatprep.subr.mxu0 0.0
    %246 = vmatpush1.msra.mxu0 0.0
    %247 = vmatprep.subr.mxu0 0.0
    %248 = vmatpush1.msra.mxu0 %v224
    %249 = vmatprep.subr.mxu0 0.0
    %250 = vmatpush1.msra.mxu0 %v223
    %251 = vmatprep.subr.mxu0 0.0
    %252 = vmatpush1.msra.mxu0 %v222
    %253 = vmatprep.subr.mxu0 0.0
    %254 = vmatpush1.msra.mxu0 %v221
    %255 = vmatprep.subr.mxu0 0.0
    %256 = vmatpush1.msra.mxu0 %v220
    %257 = vmatprep.subr.mxu0 0.0
    %258 = vmatpush1.msra.mxu0 %v219
    %259 = vmatprep.subr.mxu0 0.0
    %260 = vmatpush1.msra.mxu0 %v218
    %261 = vmatprep.subr.mxu0 0.0
    %262 = vmatpush1.msra.mxu0 %v217
    %263 = vmatprep.subr.mxu0 0.0
    %264 = vmatpush2.msra.mxu0 0.0
    %265 = vmatprep.subr.mxu0 0.0
    %266 = vmatpush2.msra.mxu0 0.0
    %267 = vmatprep.subr.mxu0 0.0
    %268 = vmatpush2.msra.mxu0 0.0
    %269 = vmatprep.subr.mxu0 0.0
    %270 = vmatpush2.msra.mxu0 0.0
    %271 = vmatprep.subr.mxu0 0.0
    %272 = vmatpush2.msra.mxu0 0.0
    %273 = vmatprep.subr.mxu0 0.0
    %274 = vmatpush2.msra.mxu0 0.0
    %275 = vmatprep.subr.mxu0 0.0
    %276 = vmatpush2.msra.mxu0 0.0
    %277 = vmatprep.subr.mxu0 0.0
    %278 = vmatpush2.msra.mxu0 0.0
    %279 = vmatprep.subr.mxu0 0.0
    %280 = vmatpush2.msra.mxu0 0.0
    %281 = vmatprep.subr.mxu0 0.0
    %282 = vmatpush2.msra.mxu0 0.0
    %283 = vmatprep.subr.mxu0 0.0
    %284 = vmatpush2.msra.mxu0 0.0
    %285 = vmatprep.subr.mxu0 0.0
    %286 = vmatpush2.msra.mxu0 0.0
    %287 = vmatprep.subr.mxu0 0.0
    %288 = vmatpush2.msra.mxu0 0.0
    %289 = vmatprep.subr.mxu0 0.0
    %290 = vmatpush2.msra.mxu0 0.0
    %291 = vmatprep.subr.mxu0 0.0
    %292 = vmatpush2.msra.mxu0 0.0
    %293 = vmatprep.subr.mxu0 0.0
    %294 = vmatpush2.msra.mxu0 0.0
    %295 = vmatprep.mubr.f32.mxu0 0.0
    %296 = vmatmul.mubr.f32.gmra.mxu0 %v226
    %v297 = vpop.f32.mrf.mxu0
    %v298 = vadd.f32 0.0, %v297
    %v299 = vpop.f32.mrf.mxu0
    %300 = vmatprep.mubr.f32.mxu0 0.0
    %301 = vmatmul.mubr.f32.gmra.mxu0 %v229
    %v302 = vpop.f32.mrf.mxu0
    %v303 = vadd.f32 0.0, %v302
    %v304 = vpop.f32.mrf.mxu0
    %305 = vdwg.mxu0
    %v306 = vadd.f32 %v204, %v298
    %v307 = vadd.f32 %v209, %v303
    %s308 = sadd.s32 %s24, 3
    %s309 = scalar_lea.vmem %s0, %s308
    %v310 = vld [vmem:[%s309] sm:$0xff]
    %v311 = vld [vmem:[%s309 + $0x10] sm:$0xff]
    %s312 = scalar_lea.vmem %s1, 192
    %v313 = vld [vmem:[%s312] sm:$0xff]
    %v314 = vld [vmem:[%s312 + $0x8] sm:$0xff]
    %v315 = vld [vmem:[%s312 + $0x10] sm:$0xff]
    %v316 = vld [vmem:[%s312 + $0x18] sm:$0xff]
    %v317 = vld [vmem:[%s312 + $0x20] sm:$0xff]
    %v318 = vld [vmem:[%s312 + $0x28] sm:$0xff]
    %v319 = vld [vmem:[%s312 + $0x30] sm:$0xff]
    %v320 = vld [vmem:[%s312 + $0x38] sm:$0xff]
    %v322 = vsel %vm49, %v310, 0
    %v325 = vsel %vm49, %v311, 0
    %327 = vmatprep.subr.mxu0 0.0
    %328 = vmatpush1.msra.mxu0 0.0
    %329 = vmatprep.subr.mxu0 0.0
    %330 = vmatpush1.msra.mxu0 0.0
    %331 = vmatprep.subr.mxu0 0.0
    %332 = vmatpush1.msra.mxu0 0.0
    %333 = vmatprep.subr.mxu0 0.0
    %334 = vmatpush1.msra.mxu0 0.0
    %335 = vmatprep.subr.mxu0 0.0
    %336 = vmatpush1.msra.mxu0 0.0
    %337 = vmatprep.subr.mxu0 0.0
    %338 = vmatpush1.msra.mxu0 0.0
    %339 = vmatprep.subr.mxu0 0.0
    %340 = vmatpush1.msra.mxu0 0.0
    %341 = vmatprep.subr.mxu0 0.0
    %342 = vmatpush1.msra.mxu0 0.0
    %343 = vmatprep.subr.mxu0 0.0
    %344 = vmatpush1.msra.mxu0 %v320
    %345 = vmatprep.subr.mxu0 0.0
    %346 = vmatpush1.msra.mxu0 %v319
    %347 = vmatprep.subr.mxu0 0.0
    %348 = vmatpush1.msra.mxu0 %v318
    %349 = vmatprep.subr.mxu0 0.0
    %350 = vmatpush1.msra.mxu0 %v317
    %351 = vmatprep.subr.mxu0 0.0
    %352 = vmatpush1.msra.mxu0 %v316
    %353 = vmatprep.subr.mxu0 0.0
    %354 = vmatpush1.msra.mxu0 %v315
    %355 = vmatprep.subr.mxu0 0.0
    %356 = vmatpush1.msra.mxu0 %v314
    %357 = vmatprep.subr.mxu0 0.0
    %358 = vmatpush1.msra.mxu0 %v313
    %359 = vmatprep.subr.mxu0 0.0
    %360 = vmatpush2.msra.mxu0 0.0
    %361 = vmatprep.subr.mxu0 0.0
    %362 = vmatpush2.msra.mxu0 0.0
    %363 = vmatprep.subr.mxu0 0.0
    %364 = vmatpush2.msra.mxu0 0.0
    %365 = vmatprep.subr.mxu0 0.0
    %366 = vmatpush2.msra.mxu0 0.0
    %367 = vmatprep.subr.mxu0 0.0
    %368 = vmatpush2.msra.mxu0 0.0
    %369 = vmatprep.subr.mxu0 0.0
    %370 = vmatpush2.msra.mxu0 0.0
    %371 = vmatprep.subr.mxu0 0.0
    %372 = vmatpush2.msra.mxu0 0.0
    %373 = vmatprep.subr.mxu0 0.0
    %374 = vmatpush2.msra.mxu0 0.0
    %375 = vmatprep.subr.mxu0 0.0
    %376 = vmatpush2.msra.mxu0 0.0
    %377 = vmatprep.subr.mxu0 0.0
    %378 = vmatpush2.msra.mxu0 0.0
    %379 = vmatprep.subr.mxu0 0.0
    %380 = vmatpush2.msra.mxu0 0.0
    %381 = vmatprep.subr.mxu0 0.0
    %382 = vmatpush2.msra.mxu0 0.0
    %383 = vmatprep.subr.mxu0 0.0
    %384 = vmatpush2.msra.mxu0 0.0
    %385 = vmatprep.subr.mxu0 0.0
    %386 = vmatpush2.msra.mxu0 0.0
    %387 = vmatprep.subr.mxu0 0.0
    %388 = vmatpush2.msra.mxu0 0.0
    %389 = vmatprep.subr.mxu0 0.0
    %390 = vmatpush2.msra.mxu0 0.0
    %391 = vmatprep.mubr.f32.mxu0 0.0
    %392 = vmatmul.mubr.f32.gmra.mxu0 %v322
    %v393 = vpop.f32.mrf.mxu0
    %v394 = vadd.f32 0.0, %v393
    %v395 = vpop.f32.mrf.mxu0
    %396 = vmatprep.mubr.f32.mxu0 0.0
    %397 = vmatmul.mubr.f32.gmra.mxu0 %v325
    %v398 = vpop.f32.mrf.mxu0
    %v399 = vadd.f32 0.0, %v398
    %v400 = vpop.f32.mrf.mxu0
    %401 = vdwg.mxu0
    %v402 = vadd.f32 %v306, %v394
    %v403 = vadd.f32 %v307, %v399
    %v404 = vld [vmem:[#allocation2] sm:$0xff]
    %v405 = vld [vmem:[#allocation2 + $0x8] sm:$0xff]
    %v406 = vadd.f32 %v404, %v402
    %v407 = vadd.f32 %v405, %v403
    %vm408 = vcmask 130048
    %409 = vst.msk [vmem:[#allocation2] sm:$0xff] %vm408, %v406
    %410 = vst.msk [vmem:[#allocation2 + $0x8] sm:$0xff] %vm408, %v407
    // Predicated region
    $region18: #{tpu_custom_call.1} parent=1 // pred_check
      %p411 = pneg %p15
    $region19: #{tpu_custom_call.1} parent=1 // pred_check_branch
      %413 = sbr.rel (%p411) target = $region21
    $region20: #{tpu_custom_call.1} parent=1 // pred_region
      %v414 = vld [vmem:[#allocation2] sm:$0xff]
      %v415 = vld [vmem:[#allocation2 + $0x8] sm:$0xff]
      %v416 = vld [vmem:[%s2] sm:$0x1]
      %v418 = vlaneseq
      %v419 = vshrl.u32 %v418, 7
      %v420 = vsub.s32 0, %v419
      %v421 = vrot.slane %v416, %v420
      %v423 = vadd.f32 %v414, %v421
      %v424 = vadd.f32 %v415, %v421
      %425 = vst.msk [vmem:[#allocation3] sm:$0xff] %vm408, %v423
      %426 = vst.msk [vmem:[#allocation3 + $0x8] sm:$0xff] %vm408, %v424
    $region21: #{tpu_custom_call.1} parent=1 // pred_fallthru
      _
    // Predicated region
    $region22: #{tpu_custom_call.1} parent=1 // pred_check
      _
    $region23: #{tpu_custom_call.1} parent=1 // pred_check_branch
      %428 = sbr.rel (0) target = $region25
    $region24: #{tpu_custom_call.1} parent=1 // pred_region
      %s430 = ssub.s32 256, 256
      %431 = vsyncadd [#allocation4], %s430
      %s432 = sshll.u32 [#allocation3], 4
      %s433 = int_to_ptr.vmem [resolvable:$true] %s432
      %438 = dma.vmem_to_hbm [thread:$0]  %s433, 256, %s3, [#allocation4], 128, 128, 8
    $region25: #{tpu_custom_call.1} parent=1 // pred_fallthru
      _
    // Predicated region
    $region26: #{tpu_custom_call.1} parent=1 // pred_check
      _
    $region27: #{tpu_custom_call.1} parent=1 // pred_check_branch
      %440 = sbr.rel (0) target = $region29
    $region28: #{tpu_custom_call.1} parent=1 // pred_region
      %441 = dma.done [#allocation4], 256
    $region29: #{tpu_custom_call.1} parent=1 // pred_fallthru
      _
    %442 = vsyncpa [#allocation4], 1

</llo_original>
